<compile_context>
chip_gen: v6e
topology: v6e:2x2x1
jax: 0.10.0
libtpu: 0.0.40
codegen_flags: <defaults>
</compile_context>

<pallas_src>
import functools
import math

import jax
import jax.numpy as jnp
from jax.experimental import pallas as pl
from jax.experimental.pallas import tpu as pltpu


def _round_up(x, m):
    return (x + m - 1) // m * m


# ---------------------------------------------------------------------------
# Kernel
# ---------------------------------------------------------------------------
def ffn_kernel(x_ref, w13_ref, w2_ref, o_ref, acc_ref, *, th, approx_sigmoid):
    """One (row-tile i, hidden-chunk k) step of the fused SwiGLU FFN.

    x_ref:   (tm, D)    bf16 row tile             (resident across the k axis)
    w13_ref: (D, 2*th)  bf16 chunk k of the interleaved [w1^T | w3^T] weight
    w2_ref:  (th, D)    bf16 chunk k of w2^T
    o_ref:   (tm, D)    output tile, written on the last hidden chunk
    acc_ref: (tm, D)    f32 accumulator scratch, lives across the k axis
    """
    k = pl.program_id(1)

    @pl.when(k == 0)
    def _init():
        acc_ref[...] = jnp.zeros_like(acc_ref)

    x = x_ref[...]
    # Single wide up-projection: (tm, D) @ (D, 2*th) -> (tm, 2*th), f32 accum.
    h13 = jnp.dot(x, w13_ref[...], preferred_element_type=jnp.float32)
    h1 = h13[:, :th]        # w1(x) chunk
    h3 = h13[:, th:]        # w3(x) chunk

    # SiLU(h1) = h1 * sigmoid(h1); exp + reciprocal land on the EUP slot under
    # the MXU.  approx_sigmoid=True uses the approximate vrcp (~1e-3 rel err).
    swish = h1 * pl.reciprocal(1.0 + jnp.exp(-h1), approx=approx_sigmoid)
    gated = (swish * h3).astype(jnp.bfloat16)        # bf16 for the MXU

    acc_ref[...] += jnp.dot(gated, w2_ref[...], preferred_element_type=jnp.float32)

    @pl.when(k == pl.num_programs(1) - 1)
    def _store():
        o_ref[...] = acc_ref[...].astype(o_ref.dtype)


# ---------------------------------------------------------------------------
# One-time weight preparation (hoisted out of the forward path)
# ---------------------------------------------------------------------------
def prepare_weights(w1, w2, w3, *, th=512):
    """torch layout in: w1, w3: (H, D); w2: (D, H).

    Returns:
      w13t: (D, 2*H_pad) bf16 — per-hidden-chunk interleaved [w1^T | w3^T]
      w2t:  (H_pad, D)   bf16 — w2^T with zero-padded rows
      th:   effective hidden-chunk size (multiple of 128); pass to feed_forward.
    """
    H, D = w1.shape
    th = _round_up(min(th, _round_up(H, 128)), 128)
    H_pad = _round_up(H, th)

    w1t = jnp.transpose(w1)            # (D, H)
    w3t = jnp.transpose(w3)            # (D, H)
    w2t = jnp.transpose(w2)            # (H, D)
    if H_pad != H:
        # Zero-padded hidden columns/rows contribute exactly 0 to the output.
        w1t = jnp.pad(w1t, ((0, 0), (0, H_pad - H)))
        w3t = jnp.pad(w3t, ((0, 0), (0, H_pad - H)))
        w2t = jnp.pad(w2t, ((0, H_pad - H), (0, 0)))

    nk = H_pad // th
    # Interleave per hidden chunk so one (D, 2*th) BlockSpec at block index k
    # holds [w1^T chunk k | w3^T chunk k]: one DMA + one wide matmul per step.
    w13t = jnp.concatenate(
        [w1t.reshape(D, nk, 1, th), w3t.reshape(D, nk, 1, th)], axis=2
    ).reshape(D, 2 * H_pad)

    # TODO(synk): optional int8 (v5e/v6e) / fp8 (v7x) weight quantization here
    # would halve weight HBM traffic and per-chunk VMEM.
    return w13t.astype(jnp.bfloat16), w2t.astype(jnp.bfloat16), th


# ---------------------------------------------------------------------------
# VMEM-aware tile selection
# ---------------------------------------------------------------------------
def _vmem_capacity_bytes():
    """Physical VMEM per TensorCore; conservative (v7x-sized) fallback."""
    try:
        cap = int(pltpu.get_tpu_info().vmem_capacity_bytes)
        if cap > 0:
            return cap
    except Exception:
        pass
    return 64 * 1024 * 1024


def _vmem_estimate(tm, D, th, out_itemsize):
    bf16 = 2
    x_bytes = 1 * tm * D * bf16              # x tile: single-buffered (pl.Buffered(1))
    w13_bytes = 2 * D * (2 * th) * bf16      # fused [w1|w3]^T chunk, double-buffered
    w2_bytes = 2 * th * D * bf16             # w2^T chunk, double-buffered
    out_bytes = 2 * tm * D * out_itemsize    # out tile, double-buffered
    acc_bytes = tm * D * 4                   # f32 accumulator scratch
    tmp_bytes = tm * (2 * th) * 4 + tm * th * (4 + 2)   # h13 + swish + gated
    return x_bytes + w13_bytes + w2_bytes + out_bytes + acc_bytes + tmp_bytes


_TM_CANDIDATES = (1024, 896, 768, 640, 512, 384, 256, 192, 128, 64, 32, 16)


def _pick_tm(M, D, th, out_itemsize, budget, tm_cap):
    # bf16 packs two rows per sublane -> keep row tiles multiples of 16.
    m_cap = _round_up(M, 16)
    for tm in _TM_CANDIDATES:
        if tm > tm_cap:
            continue
        tm_eff = min(tm, m_cap)
        if _vmem_estimate(tm_eff, D, th, out_itemsize) <= budget:
            return tm_eff
    return min(16, m_cap)


# ---------------------------------------------------------------------------
# Forward
# ---------------------------------------------------------------------------
@functools.partial(jax.jit, static_argnames=("th", "tm", "out_dtype", "approx_sigmoid"))
def feed_forward(x, w13t, w2t, *, th, tm=None, out_dtype=None, approx_sigmoid=True):
    """x: (B, S, D). w13t/w2t from prepare_weights. tm (if given) is an upper bound."""
    B, S, D = x.shape
    H_pad = w2t.shape[0]
    assert w13t.shape == (D, 2 * H_pad) and H_pad % th == 0
    M = B * S
    out_dtype = jnp.dtype(x.dtype if out_dtype is None else out_dtype)

    cap = _vmem_capacity_bytes()
    budget = int(0.80 * cap)                  # headroom for compiler scratch / semaphores
    tm_eff = _pick_tm(M, D, th, out_dtype.itemsize, budget, tm_cap=(tm or 1024))
    M_pad = _round_up(M, tm_eff)

    x2 = x.reshape(M, D).astype(jnp.bfloat16)
    if M_pad != M:
        x2 = jnp.pad(x2, ((0, M_pad - M), (0, 0)))

    grid = (M_pad // tm_eff, H_pad // th)     # (row tiles [parallel], H chunks [arbitrary])

    est = _vmem_estimate(tm_eff, D, th, out_dtype.itemsize)
    # Always set: covers v5e's ~16 MiB default limit, never exceeds physical
    # VMEM (v7x: 64 MiB per TensorCore).
    vmem_limit = min(int(0.9 * cap), max(int(est * 1.25), 32 * 1024 * 1024))

    kernel = functools.partial(ffn_kernel, th=th, approx_sigmoid=approx_sigmoid)

    out = pl.pallas_call(
        kernel,
        out_shape=jax.ShapeDtypeStruct((M_pad, D), out_dtype),
        grid_spec=pltpu.PrefetchScalarGridSpec(
            num_scalar_prefetch=0,
            grid=grid,
            in_specs=[
                # x row tile: block index constant across k -> single buffer.
                pl.BlockSpec((tm_eff, D), lambda i, k: (i, 0),
                             pipeline_mode=pl.Buffered(1)),
                pl.BlockSpec((D, 2 * th), lambda i, k: (0, k)),   # [w1|w3]^T chunk
                pl.BlockSpec((th, D), lambda i, k: (k, 0)),       # w2^T chunk
                # TODO(synk): on v6e, if a profile shows exposed weight DMA, try
                # pipeline_mode=pl.Buffered(3) on the two weight specs (not v7x).
            ],
            out_specs=pl.BlockSpec((tm_eff, D), lambda i, k: (i, 0)),
            scratch_shapes=[pltpu.VMEM((tm_eff, D), jnp.float32)],
        ),
        compiler_params=pltpu.CompilerParams(
            dimension_semantics=("parallel", "arbitrary"),
            vmem_limit_bytes=vmem_limit,
        ),
    )(x2, w13t, w2t)

    # TODO(synk): v7x decode shapes (grid[0] == 1): split the H axis across the
    # two TensorCores with per-core partial sums and/or share weight-chunk DMAs
    # between cores (VMEM_SHARED) instead of each TC streaming identical chunks.
    return out[:M].reshape(B, S, D).astype(out_dtype)


def _llama_hidden_dim(dim, multiple_of, ffn_dim_multiplier=None):
    hidden_dim = int(8 * dim / 3)
    if ffn_dim_multiplier is not None:
        hidden_dim = int(ffn_dim_multiplier * hidden_dim)
    return multiple_of * ((hidden_dim + multiple_of - 1) // multiple_of)


if __name__ == "__main__":
    # Small ModelArgs-consistent config: dim=128, multiple_of=128 -> hidden=384.
    dim = 128
    multiple_of = 128
    hidden = _llama_hidden_dim(dim, multiple_of)   # int(8*128/3)=341 -> 384
    batch, seq = 2, 8

    key = jax.random.PRNGKey(0)
    kx, k1, k2, k3 = jax.random.split(key, 4)

    x = jax.random.normal(kx, (batch, seq, dim), dtype=jnp.float32)

    # Deterministic init mimicking torch.nn.Linear (U(+/- 1/sqrt(fan_in))), bias=False.
    b1 = 1.0 / math.sqrt(dim)
    b2 = 1.0 / math.sqrt(hidden)
    w1 = jax.random.uniform(k1, (hidden, dim), jnp.float32, -b1, b1)   # w1.weight
    w2 = jax.random.uniform(k2, (dim, hidden), jnp.float32, -b2, b2)   # w2.weight
    w3 = jax.random.uniform(k3, (hidden, dim), jnp.float32, -b1, b1)   # w3.weight

    # One-time weight prep (transpose + bf16 + fused/interleaved w1|w3 layout).
    w13t, w2t, th = prepare_weights(w1, w2, w3, th=512)

    out = feed_forward(x, w13t, w2t, th=th)
    out = jax.block_until_ready(out)

    # Pure-JAX reference at matching precision (bf16 matmuls, f32 accumulation).
    x2 = x.reshape(-1, dim).astype(jnp.bfloat16)
    h1 = jnp.dot(x2, w1.T.astype(jnp.bfloat16), preferred_element_type=jnp.float32)
    h3 = jnp.dot(x2, w3.T.astype(jnp.bfloat16), preferred_element_type=jnp.float32)
    gated = (h1 * jax.nn.sigmoid(h1) * h3).astype(jnp.bfloat16)
    ref = jnp.dot(gated, w2.T.astype(jnp.bfloat16),
                  preferred_element_type=jnp.float32).reshape(batch, seq, dim)

    assert out.shape == (batch, seq, dim)
    assert out.dtype == x.dtype
    assert jnp.allclose(out, ref.astype(out.dtype), atol=2e-2, rtol=2e-2), "mismatch vs reference"

    print("KERNEL_OK")
</pallas_src>

<mosaic_0001>
module attributes {stable_mosaic.version = 11 : i64} {
  func.func @ffn_kernel(%arg0: i32, %arg1: i32, %arg2: memref<16x128xbf16, #tpu.memory_space<vmem>>, %arg3: memref<128x768xbf16, #tpu.memory_space<vmem>>, %arg4: memref<384x128xbf16, #tpu.memory_space<vmem>>, %arg5: memref<16x128xf32, #tpu.memory_space<vmem>>, %arg6: memref<16x128xf32, #tpu.memory_space<vmem>>) attributes {dimension_semantics = [#tpu.dimension_semantics<parallel>, #tpu.dimension_semantics<arbitrary>], iteration_bounds = array<i64: 1, 1>, scalar_prefetch = 0 : i64, scratch_operands = 1 : i64, tpu.core_type = #tpu.core_type<tc>, window_params = [{pipeline_mode = #tpu.pipeline_mode<synchronous>, transform_indices = @transform_0, window_bounds = array<i64: 16, 128>}, {transform_indices = @transform_1, window_bounds = array<i64: 128, 768>}, {transform_indices = @transform_2, window_bounds = array<i64: 384, 128>}, {transform_indices = @transform_3, window_bounds = array<i64: 16, 128>}]} {
    %c0_i32 = arith.constant 0 : i32
    %0 = arith.cmpi eq, %arg1, %c0_i32 : i32
    %1 = arith.extui %0 : i1 to i32
    %c0_i32_0 = arith.constant 0 : i32
    %2 = arith.cmpi ne, %1, %c0_i32_0 : i32
    scf.if %2 {
      %cst_15 = arith.constant 0.000000e+00 : f32
      %25 = vector.broadcast %cst_15 : f32 to vector<16x128xf32>
      %c0_16 = arith.constant 0 : index
      %c0_17 = arith.constant 0 : index
      %26 = vector.load %arg6[%c0_16, %c0_17] : memref<16x128xf32, #tpu.memory_space<vmem>>, vector<16x128xf32>
      tpu.vector_store %arg6[%c0_16, %c0_17], %25 {strides = array<i32>} : memref<16x128xf32, #tpu.memory_space<vmem>>, vector<16x128xf32>,
    } else {
    }
    %c0 = arith.constant 0 : index
    %c0_1 = arith.constant 0 : index
    %3 = vector.load %arg2[%c0, %c0_1] : memref<16x128xbf16, #tpu.memory_space<vmem>>, vector<16x128xbf16>
    %c0_2 = arith.constant 0 : index
    %c0_3 = arith.constant 0 : index
    %4 = vector.load %arg3[%c0_2, %c0_3] : memref<128x768xbf16, #tpu.memory_space<vmem>>, vector<128x768xbf16>
    %cst = arith.constant dense<0.000000e+00> : vector<16x768xf32>
    %5 = tpu.matmul %3, %4, %cst {dimension_numbers = #tpu.dot_dimension_numbers<[1], [0], [0], [1], [0, 0, 1, 1], [], []>} : vector<16x128xbf16>, vector<128x768xbf16>, vector<16x768xf32> -> vector<16x768xf32>
    %6 = vector.extract_strided_slice %5 {offsets = [0, 0], sizes = [16, 384], strides = [1, 1]} : vector<16x768xf32> to vector<16x384xf32>
    %7 = vector.extract_strided_slice %5 {offsets = [0, 384], sizes = [16, 384], strides = [1, 1]} : vector<16x768xf32> to vector<16x384xf32>
    %cst_4 = arith.constant 0.000000e+00 : f32
    %8 = vector.broadcast %cst_4 : f32 to vector<16x384xf32>
    %9 = arith.subf %8, %6 : vector<16x384xf32>
    %10 = math.exp %9 : vector<16x384xf32>
    %cst_5 = arith.constant 1.000000e+00 : f32
    %11 = vector.broadcast %cst_5 : f32 to vector<16x384xf32>
    %12 = arith.addf %11, %10 : vector<16x384xf32>
    %13 = tpu.reciprocal %12 {approx = true} : vector<16x384xf32> -> vector<16x384xf32>
    %14 = arith.mulf %6, %13 : vector<16x384xf32>
    %15 = arith.mulf %14, %7 : vector<16x384xf32>
    %16 = arith.truncf %15 : vector<16x384xf32> to vector<16x384xbf16>
    %c0_6 = arith.constant 0 : index
    %c0_7 = arith.constant 0 : index
    %17 = vector.load %arg6[%c0_6, %c0_7] : memref<16x128xf32, #tpu.memory_space<vmem>>, vector<16x128xf32>
    %c0_8 = arith.constant 0 : index
    %c0_9 = arith.constant 0 : index
    %18 = vector.load %arg4[%c0_8, %c0_9] : memref<384x128xbf16, #tpu.memory_space<vmem>>, vector<384x128xbf16>
    %cst_10 = arith.constant dense<0.000000e+00> : vector<16x128xf32>
    %19 = tpu.matmul %16, %18, %cst_10 {dimension_numbers = #tpu.dot_dimension_numbers<[1], [0], [0], [1], [0, 0, 1, 1], [], []>} : vector<16x384xbf16>, vector<384x128xbf16>, vector<16x128xf32> -> vector<16x128xf32>
    %20 = arith.addf %17, %19 : vector<16x128xf32>
    %c0_11 = arith.constant 0 : index
    %c0_12 = arith.constant 0 : index
    %21 = vector.load %arg6[%c0_11, %c0_12] : memref<16x128xf32, #tpu.memory_space<vmem>>, vector<16x128xf32>
    tpu.vector_store %arg6[%c0_11, %c0_12], %20 {strides = array<i32>} : memref<16x128xf32, #tpu.memory_space<vmem>>, vector<16x128xf32>,
    %c0_i32_13 = arith.constant 0 : i32
    %22 = arith.cmpi eq, %arg1, %c0_i32_13 : i32
    %23 = arith.extui %22 : i1 to i32
    %c0_i32_14 = arith.constant 0 : i32
    %24 = arith.cmpi ne, %23, %c0_i32_14 : i32
    scf.if %24 {
      %c0_15 = arith.constant 0 : index
      %c0_16 = arith.constant 0 : index
      %25 = vector.load %arg6[%c0_15, %c0_16] : memref<16x128xf32, #tpu.memory_space<vmem>>, vector<16x128xf32>
      %c0_17 = arith.constant 0 : index
      %c0_18 = arith.constant 0 : index
      %26 = vector.load %arg5[%c0_17, %c0_18] : memref<16x128xf32, #tpu.memory_space<vmem>>, vector<16x128xf32>
      tpu.vector_store %arg5[%c0_17, %c0_18], %25 {strides = array<i32>} : memref<16x128xf32, #tpu.memory_space<vmem>>, vector<16x128xf32>,
    } else {
    }
    return
  }
  func.func @transform_0(%arg0: i32, %arg1: i32) -> (i32, i32) {
    %c0_i32 = arith.constant 0 : i32
    %c0_i32_0 = arith.constant 0 : i32
    return %arg0, %c0_i32 : i32, i32
  }
  func.func @transform_1(%arg0: i32, %arg1: i32) -> (i32, i32) {
    %c0_i32 = arith.constant 0 : i32
    %c0_i32_0 = arith.constant 0 : i32
    return %c0_i32, %arg1 : i32, i32
  }
  func.func @transform_2(%arg0: i32, %arg1: i32) -> (i32, i32) {
    %c0_i32 = arith.constant 0 : i32
    %c0_i32_0 = arith.constant 0 : i32
    return %arg1, %c0_i32 : i32, i32
  }
  func.func @transform_3(%arg0: i32, %arg1: i32) -> (i32, i32) {
    %c0_i32 = arith.constant 0 : i32
    %c0_i32_0 = arith.constant 0 : i32
    return %arg0, %c0_i32 : i32, i32
  }
}

</mosaic_0001>

<llo_original>
// kernel: feed_forward.1
$region0: #{feed_forward.1}
  #allocation0 [shape = 'u32[]', space=smem, size = 0x4, offset = 0x4, fixed_abs, tag = 'smem constant byte address 0x4 - core index']
  #allocation1 [shape = 'u32[144,128]{1,0:T(1,128)}', space=vmem, size = 0x12000, scoped, tag = 'internal scratch']
  #allocation2 [shape = 'f32[16,128]{1,0:T(8,128)}', space=vmem, size = 0x2000, scoped, tag = 'scratch operand']
  %s0 = inlined_call_operand.vmem [shape: bf16[16,128], index: 0, kind: input, shape index: {}]
  %s1 = inlined_call_operand.hbm [shape: bf16[128,768], index: 1, kind: input, shape index: {}]
  %s2 = inlined_call_operand.hbm [shape: bf16[384,128], index: 2, kind: input, shape index: {}]
  %s3 = inlined_call_operand.hbm [shape: f32[16,128], index: 3, kind: output, shape index: {}]
  %s4 = sld [smem:[#allocation0]]
  $region38: #{feed_forward.1} parent=0
    _
  %s6 = ssub.s32 1, %s4
  %s7 = scalar_select 0, %s6, %s4
  $region1: #{feed_forward.1} parent=0
    #allocation3 [shape = 'u8[196608]{0}', space=vmem, size = 0x30000, scoped, tag = 'input window, operand 1, single buffered']
    #allocation4 [shape = 's32[1]{0}', space=sflag, size = 0x4, scoped, tag = 'scoped memory for feed_forward.1']
    #allocation5 [shape = 's32[1]{0}', space=sflag, size = 0x4, scoped, tag = 'scoped memory for feed_forward.1']
    #allocation6 [shape = 'u8[98304]{0}', space=vmem, size = 0x18000, scoped, tag = 'input window, operand 2, single buffered']
    #allocation7 [shape = 's32[1]{0}', space=sflag, size = 0x4, scoped, tag = 'scoped memory for feed_forward.1']
    #allocation8 [shape = 'u8[8192]{0}', space=vmem, size = 0x2000, scoped, tag = 'output window, operand 0, single buffered']
    %8 = vsyncpa [#allocation4], 0
    %9 = vsyncpa [#allocation7], 0
    %10 = vsyncpa [#allocation5], 0
    // Predicated region
    $region2: #{feed_forward.1} parent=1 // pred_check
      _
    $region3: #{feed_forward.1} parent=1 // pred_check_branch
      %12 = sbr.rel (0) target = $region5
    $region4: #{feed_forward.1} parent=1 // pred_region
      _
    $region5: #{feed_forward.1} parent=1 // pred_fallthru
      _
    // Predicated region
    $region6: #{feed_forward.1} parent=1 // pred_check
      _
    $region7: #{feed_forward.1} parent=1 // pred_check_branch
      %14 = sbr.rel (0) target = $region9
    $region8: #{feed_forward.1} parent=1 // pred_region
      %s16 = ssub.s32 6144, 6144
      %17 = vsyncadd [#allocation4], %s16
      %s18 = sshll.u32 [#allocation3], 4
      %s19 = int_to_ptr.vmem [resolvable:$true] %s18
      %24 = dma.hbm_to_vmem [thread:$0]  %s1, 6144, %s19, [#allocation4], 384, 384, 24
    $region9: #{feed_forward.1} parent=1 // pred_fallthru
      _
    // Predicated region
    $region10: #{feed_forward.1} parent=1 // pred_check
      _
    $region11: #{feed_forward.1} parent=1 // pred_check_branch
      %26 = sbr.rel (0) target = $region13
    $region12: #{feed_forward.1} parent=1 // pred_region
      %s28 = ssub.s32 3072, 3072
      %29 = vsyncadd [#allocation7], %s28
      %s30 = sshll.u32 [#allocation6], 4
      %s31 = int_to_ptr.vmem [resolvable:$true] %s30
      %36 = dma.hbm_to_vmem [thread:$0]  %s2, 3072, %s31, [#allocation7], 64, 64, 4
    $region13: #{feed_forward.1} parent=1 // pred_fallthru
      _
    // Predicated region
    $region14: #{feed_forward.1} parent=1 // pred_check
      _
    $region15: #{feed_forward.1} parent=1 // pred_check_branch
      %38 = sbr.rel (0) target = $region17
    $region16: #{feed_forward.1} parent=1 // pred_region
      %39 = dma.done [#allocation4], 6144
    $region17: #{feed_forward.1} parent=1 // pred_fallthru
      _
    // Predicated region
    $region18: #{feed_forward.1} parent=1 // pred_check
      _
    $region19: #{feed_forward.1} parent=1 // pred_check_branch
      %41 = sbr.rel (0) target = $region21
    $region20: #{feed_forward.1} parent=1 // pred_region
      %42 = dma.done [#allocation7], 3072
    $region21: #{feed_forward.1} parent=1 // pred_fallthru
      _
    %p44 = scmp.eq.s32.totalorder 0, 0
    // Predicated region
    $region22: #{feed_forward.1} parent=1 // pred_check
      %p45 = pneg %p44
    $region23: #{feed_forward.1} parent=1 // pred_check_branch
      %47 = sbr.rel (%p45) target = $region25
    $region24: #{feed_forward.1} parent=1 // pred_region
      %48 = vst [vmem:[#allocation2] sm:$0xff] 0.0
      %49 = vst [vmem:[#allocation2 + $0x8] sm:$0xff] 0.0
    $region25: #{feed_forward.1} parent=1 // pred_fallthru
      _
    %v50 = vld [vmem:[%s0] sm:$0xf]
    %v51 = vld [vmem:[%s0 + $0x4] sm:$0xf]
    %v52 = vld [vmem:[#allocation3] sm:$0xff]
    %v53 = vld [vmem:[#allocation3 + $0x8] sm:$0xff]
    %v54 = vld [vmem:[#allocation3 + $0x10] sm:$0xff]
    %v55 = vld [vmem:[#allocation3 + $0x18] sm:$0xff]
    %v56 = vld [vmem:[#allocation3 + $0x20] sm:$0xff]
    %v57 = vld [vmem:[#allocation3 + $0x28] sm:$0xff]
    %v58 = vld [vmem:[#allocation3 + $0x30] sm:$0xff]
    %v59 = vld [vmem:[#allocation3 + $0x38] sm:$0xff]
    %v60 = vld [vmem:[#allocation3 + $0x40] sm:$0xff]
    %v61 = vld [vmem:[#allocation3 + $0x48] sm:$0xff]
    %v62 = vld [vmem:[#allocation3 + $0x50] sm:$0xff]
    %v63 = vld [vmem:[#allocation3 + $0x58] sm:$0xff]
    %v64 = vld [vmem:[#allocation3 + $0x60] sm:$0xff]
    %v65 = vld [vmem:[#allocation3 + $0x68] sm:$0xff]
    %v66 = vld [vmem:[#allocation3 + $0x70] sm:$0xff]
    %v67 = vld [vmem:[#allocation3 + $0x78] sm:$0xff]
    %v68 = vld [vmem:[#allocation3 + $0x80] sm:$0xff]
    %v69 = vld [vmem:[#allocation3 + $0x88] sm:$0xff]
    %v70 = vld [vmem:[#allocation3 + $0x90] sm:$0xff]
    %v71 = vld [vmem:[#allocation3 + $0x98] sm:$0xff]
    %v72 = vld [vmem:[#allocation3 + $0xa0] sm:$0xff]
    %v73 = vld [vmem:[#allocation3 + $0xa8] sm:$0xff]
    %v74 = vld [vmem:[#allocation3 + $0xb0] sm:$0xff]
    %v75 = vld [vmem:[#allocation3 + $0xb8] sm:$0xff]
    %v76 = vld [vmem:[#allocation3 + $0xc0] sm:$0xff]
    %v77 = vld [vmem:[#allocation3 + $0xc8] sm:$0xff]
    %v78 = vld [vmem:[#allocation3 + $0xd0] sm:$0xff]
    %v79 = vld [vmem:[#allocation3 + $0xd8] sm:$0xff]
    %v80 = vld [vmem:[#allocation3 + $0xe0] sm:$0xff]
    %v81 = vld [vmem:[#allocation3 + $0xe8] sm:$0xff]
    %v82 = vld [vmem:[#allocation3 + $0xf0] sm:$0xff]
    %v83 = vld [vmem:[#allocation3 + $0xf8] sm:$0xff]
    %v84 = vld [vmem:[#allocation3 + $0x100] sm:$0xff]
    %v85 = vld [vmem:[#allocation3 + $0x108] sm:$0xff]
    %v86 = vld [vmem:[#allocation3 + $0x110] sm:$0xff]
    %v87 = vld [vmem:[#allocation3 + $0x118] sm:$0xff]
    %v88 = vld [vmem:[#allocation3 + $0x120] sm:$0xff]
    %v89 = vld [vmem:[#allocation3 + $0x128] sm:$0xff]
    %v90 = vld [vmem:[#allocation3 + $0x130] sm:$0xff]
    %v91 = vld [vmem:[#allocation3 + $0x138] sm:$0xff]
    %v92 = vld [vmem:[#allocation3 + $0x140] sm:$0xff]
    %v93 = vld [vmem:[#allocation3 + $0x148] sm:$0xff]
    %v94 = vld [vmem:[#allocation3 + $0x150] sm:$0xff]
    %v95 = vld [vmem:[#allocation3 + $0x158] sm:$0xff]
    %v96 = vld [vmem:[#allocation3 + $0x160] sm:$0xff]
    %v97 = vld [vmem:[#allocation3 + $0x168] sm:$0xff]
    %v98 = vld [vmem:[#allocation3 + $0x170] sm:$0xff]
    %v99 = vld [vmem:[#allocation3 + $0x178] sm:$0xff]
    %v102 = vunpack.c.l.b16 %v50
    %v103 = vunpack.c.l.b16 %v51
    %v104 = vpack.c.b16 %v103, %v102
    %v154 = vunpack.c.l.b16 %v52
    %v155 = vunpack.c.h.b16 %v52
    %v156 = vunpack.c.l.b16 %v53
    %v157 = vunpack.c.h.b16 %v53
    %v158 = vunpack.c.l.b16 %v54
    %v159 = vunpack.c.h.b16 %v54
    %v160 = vunpack.c.l.b16 %v55
    %v161 = vunpack.c.h.b16 %v55
    %v162 = vunpack.c.l.b16 %v56
    %v163 = vunpack.c.h.b16 %v56
    %v164 = vunpack.c.l.b16 %v57
    %v165 = vunpack.c.h.b16 %v57
    %v166 = vunpack.c.l.b16 %v58
    %v167 = vunpack.c.h.b16 %v58
    %v168 = vunpack.c.l.b16 %v59
    %v169 = vunpack.c.h.b16 %v59
    %v170 = vunpack.c.l.b16 %v60
    %v171 = vunpack.c.h.b16 %v60
    %v172 = vunpack.c.l.b16 %v61
    %v173 = vunpack.c.h.b16 %v61
    %v174 = vunpack.c.l.b16 %v62
    %v175 = vunpack.c.h.b16 %v62
    %v176 = vunpack.c.l.b16 %v63
    %v177 = vunpack.c.h.b16 %v63
    %v178 = vunpack.c.l.b16 %v64
    %v179 = vunpack.c.h.b16 %v64
    %v180 = vunpack.c.l.b16 %v65
    %v181 = vunpack.c.h.b16 %v65
    %v182 = vunpack.c.l.b16 %v66
    %v183 = vunpack.c.h.b16 %v66
    %v184 = vunpack.c.l.b16 %v67
    %v185 = vunpack.c.h.b16 %v67
    %v186 = vunpack.c.l.b16 %v68
    %v187 = vunpack.c.h.b16 %v68
    %v188 = vunpack.c.l.b16 %v69
    %v189 = vunpack.c.h.b16 %v69
    %v190 = vunpack.c.l.b16 %v70
    %v191 = vunpack.c.h.b16 %v70
    %v192 = vunpack.c.l.b16 %v71
    %v193 = vunpack.c.h.b16 %v71
    %v194 = vunpack.c.l.b16 %v72
    %v195 = vunpack.c.h.b16 %v72
    %v196 = vunpack.c.l.b16 %v73
    %v197 = vunpack.c.h.b16 %v73
    %v198 = vunpack.c.l.b16 %v74
    %v199 = vunpack.c.h.b16 %v74
    %v200 = vunpack.c.l.b16 %v75
    %v201 = vunpack.c.h.b16 %v75
    %v202 = vunpack.c.l.b16 %v76
    %v203 = vunpack.c.h.b16 %v76
    %v204 = vunpack.c.l.b16 %v77
    %v205 = vunpack.c.h.b16 %v77
    %v206 = vunpack.c.l.b16 %v78
    %v207 = vunpack.c.h.b16 %v78
    %v208 = vunpack.c.l.b16 %v79
    %v209 = vunpack.c.h.b16 %v79
    %v210 = vunpack.c.l.b16 %v80
    %v211 = vunpack.c.h.b16 %v80
    %v212 = vunpack.c.l.b16 %v81
    %v213 = vunpack.c.h.b16 %v81
    %v214 = vunpack.c.l.b16 %v82
    %v215 = vunpack.c.h.b16 %v82
    %v216 = vunpack.c.l.b16 %v83
    %v217 = vunpack.c.h.b16 %v83
    %v218 = vunpack.c.l.b16 %v84
    %v219 = vunpack.c.h.b16 %v84
    %v220 = vunpack.c.l.b16 %v85
    %v221 = vunpack.c.h.b16 %v85
    %v222 = vunpack.c.l.b16 %v86
    %v223 = vunpack.c.h.b16 %v86
    %v224 = vunpack.c.l.b16 %v87
    %v225 = vunpack.c.h.b16 %v87
    %v226 = vunpack.c.l.b16 %v88
    %v227 = vunpack.c.h.b16 %v88
    %v228 = vunpack.c.l.b16 %v89
    %v229 = vunpack.c.h.b16 %v89
    %v230 = vunpack.c.l.b16 %v90
    %v231 = vunpack.c.h.b16 %v90
    %v232 = vunpack.c.l.b16 %v91
    %v233 = vunpack.c.h.b16 %v91
    %v234 = vunpack.c.l.b16 %v92
    %v235 = vunpack.c.h.b16 %v92
    %v236 = vunpack.c.l.b16 %v93
    %v237 = vunpack.c.h.b16 %v93
    %v238 = vunpack.c.l.b16 %v94
    %v239 = vunpack.c.h.b16 %v94
    %v240 = vunpack.c.l.b16 %v95
    %v241 = vunpack.c.h.b16 %v95
    %v242 = vunpack.c.l.b16 %v96
    %v243 = vunpack.c.h.b16 %v96
    %v244 = vunpack.c.l.b16 %v97
    %v245 = vunpack.c.h.b16 %v97
    %v246 = vunpack.c.l.b16 %v98
    %v247 = vunpack.c.h.b16 %v98
    %v248 = vunpack.c.l.b16 %v99
    %v249 = vunpack.c.h.b16 %v99
    %v250 = vpack.c.b16 %v160, %v154
    %v251 = vpack.c.b16 %v161, %v155
    %v252 = vpack.c.b16 %v162, %v156
    %v253 = vpack.c.b16 %v163, %v157
    %v254 = vpack.c.b16 %v164, %v158
    %v255 = vpack.c.b16 %v165, %v159
    %v256 = vpack.c.b16 %v172, %v166
    %v257 = vpack.c.b16 %v173, %v167
    %v258 = vpack.c.b16 %v174, %v168
    %v259 = vpack.c.b16 %v175, %v169
    %v260 = vpack.c.b16 %v176, %v170
    %v261 = vpack.c.b16 %v177, %v171
    %v262 = vpack.c.b16 %v184, %v178
    %v263 = vpack.c.b16 %v185, %v179
    %v264 = vpack.c.b16 %v186, %v180
    %v265 = vpack.c.b16 %v187, %v181
    %v266 = vpack.c.b16 %v188, %v182
    %v267 = vpack.c.b16 %v189, %v183
    %v268 = vpack.c.b16 %v196, %v190
    %v269 = vpack.c.b16 %v197, %v191
    %v270 = vpack.c.b16 %v198, %v192
    %v271 = vpack.c.b16 %v199, %v193
    %v272 = vpack.c.b16 %v200, %v194
    %v273 = vpack.c.b16 %v201, %v195
    %v274 = vpack.c.b16 %v208, %v202
    %v275 = vpack.c.b16 %v209, %v203
    %v276 = vpack.c.b16 %v210, %v204
    %v277 = vpack.c.b16 %v211, %v205
    %v278 = vpack.c.b16 %v212, %v206
    %v279 = vpack.c.b16 %v213, %v207
    %v280 = vpack.c.b16 %v220, %v214
    %v281 = vpack.c.b16 %v221, %v215
    %v282 = vpack.c.b16 %v222, %v216
    %v283 = vpack.c.b16 %v223, %v217
    %v284 = vpack.c.b16 %v224, %v218
    %v285 = vpack.c.b16 %v225, %v219
    %v286 = vpack.c.b16 %v232, %v226
    %v287 = vpack.c.b16 %v233, %v227
    %v288 = vpack.c.b16 %v234, %v228
    %v289 = vpack.c.b16 %v235, %v229
    %v290 = vpack.c.b16 %v236, %v230
    %v291 = vpack.c.b16 %v237, %v231
    %v292 = vpack.c.b16 %v244, %v238
    %v293 = vpack.c.b16 %v245, %v239
    %v294 = vpack.c.b16 %v246, %v240
    %v295 = vpack.c.b16 %v247, %v241
    %v296 = vpack.c.b16 %v248, %v242
    %v297 = vpack.c.b16 %v249, %v243
    %346 = vmatprep.subr.bf16.mxu0 %v293
    %347 = vmatpush1.bf16.msra.mxu0 %v292
    %348 = vmatprep.subr.bf16.mxu0 %v287
    %349 = vmatpush1.bf16.msra.mxu0 %v286
    %350 = vmatprep.subr.bf16.mxu0 %v281
    %351 = vmatpush1.bf16.msra.mxu0 %v280
    %352 = vmatprep.subr.bf16.mxu0 %v275
    %353 = vmatpush1.bf16.msra.mxu0 %v274
    %354 = vmatprep.subr.bf16.mxu0 %v269
    %355 = vmatpush1.bf16.msra.mxu0 %v268
    %356 = vmatprep.subr.bf16.mxu0 %v263
    %357 = vmatpush1.bf16.msra.mxu0 %v262
    %358 = vmatprep.subr.bf16.mxu0 %v257
    %359 = vmatpush1.bf16.msra.mxu0 %v256
    %360 = vmatprep.subr.bf16.mxu0 %v251
    %361 = vmatpush1.bf16.msra.mxu0 %v250
    %362 = vmatprep.subr.bf16.mxu0 0
    %363 = vmatpush2.bf16.msra.mxu0 0
    %364 = vmatprep.subr.bf16.mxu0 0
    %365 = vmatpush2.bf16.msra.mxu0 0
    %366 = vmatprep.subr.bf16.mxu0 0
    %367 = vmatpush2.bf16.msra.mxu0 0
    %368 = vmatprep.subr.bf16.mxu0 0
    %369 = vmatpush2.bf16.msra.mxu0 0
    %370 = vmatprep.subr.bf16.mxu0 0
    %371 = vmatpush2.bf16.msra.mxu0 0
    %372 = vmatprep.subr.bf16.mxu0 0
    %373 = vmatpush2.bf16.msra.mxu0 0
    %374 = vmatprep.subr.bf16.mxu0 0
    %375 = vmatpush2.bf16.msra.mxu0 0
    %376 = vmatprep.subr.bf16.mxu0 0
    %377 = vmatpush2.bf16.msra.mxu0 0
    %378 = vmatprep.mubr.bf16.mxu0 0
    %379 = vmatmul.mubr.bf16.gmra.mxu0 %v104
    %v380 = vpop.f32.mrf.mxu0
    %v381 = vadd.f32 0.0, %v380
    %v382 = vpop.f32.mrf.mxu0
    %v383 = vadd.f32 0.0, %v382
    %v384 = vpop.f32.mrf.mxu0
    %v385 = vadd.f32 0.0, %v384
    %v386 = vpop.f32.mrf.mxu0
    %v387 = vadd.f32 0.0, %v386
    %388 = vdwg.mxu0
    %389 = vmatprep.subr.bf16.mxu0 %v295
    %390 = vmatpush1.bf16.msra.mxu0 %v294
    %391 = vmatprep.subr.bf16.mxu0 %v289
    %392 = vmatpush1.bf16.msra.mxu0 %v288
    %393 = vmatprep.subr.bf16.mxu0 %v283
    %394 = vmatpush1.bf16.msra.mxu0 %v282
    %395 = vmatprep.subr.bf16.mxu0 %v277
    %396 = vmatpush1.bf16.msra.mxu0 %v276
    %397 = vmatprep.subr.bf16.mxu0 %v271
    %398 = vmatpush1.bf16.msra.mxu0 %v270
    %399 = vmatprep.subr.bf16.mxu0 %v265
    %400 = vmatpush1.bf16.msra.mxu0 %v264
    %401 = vmatprep.subr.bf16.mxu0 %v259
    %402 = vmatpush1.bf16.msra.mxu0 %v258
    %403 = vmatprep.subr.bf16.mxu0 %v253
    %404 = vmatpush1.bf16.msra.mxu0 %v252
    %405 = vmatprep.subr.bf16.mxu0 0
    %406 = vmatpush2.bf16.msra.mxu0 0
    %407 = vmatprep.subr.bf16.mxu0 0
    %408 = vmatpush2.bf16.msra.mxu0 0
    %409 = vmatprep.subr.bf16.mxu0 0
    %410 = vmatpush2.bf16.msra.mxu0 0
    %411 = vmatprep.subr.bf16.mxu0 0
    %412 = vmatpush2.bf16.msra.mxu0 0
    %413 = vmatprep.subr.bf16.mxu0 0
    %414 = vmatpush2.bf16.msra.mxu0 0
    %415 = vmatprep.subr.bf16.mxu0 0
    %416 = vmatpush2.bf16.msra.mxu0 0
    %417 = vmatprep.subr.bf16.mxu0 0
    %418 = vmatpush2.bf16.msra.mxu0 0
    %419 = vmatprep.subr.bf16.mxu0 0
    %420 = vmatpush2.bf16.msra.mxu0 0
    %421 = vmatprep.mubr.bf16.mxu0 0
    %422 = vmatmul.mubr.bf16.gmra.mxu0 %v104
    %v423 = vpop.f32.mrf.mxu0
    %v424 = vadd.f32 0.0, %v423
    %v425 = vpop.f32.mrf.mxu0
    %v426 = vadd.f32 0.0, %v425
    %v427 = vpop.f32.mrf.mxu0
    %v428 = vadd.f32 0.0, %v427
    %v429 = vpop.f32.mrf.mxu0
    %v430 = vadd.f32 0.0, %v429
    %431 = vdwg.mxu0
    %432 = vmatprep.subr.bf16.mxu0 %v297
    %433 = vmatpush1.bf16.msra.mxu0 %v296
    %434 = vmatprep.subr.bf16.mxu0 %v291
    %435 = vmatpush1.bf16.msra.mxu0 %v290
    %436 = vmatprep.subr.bf16.mxu0 %v285
    %437 = vmatpush1.bf16.msra.mxu0 %v284
    %438 = vmatprep.subr.bf16.mxu0 %v279
    %439 = vmatpush1.bf16.msra.mxu0 %v278
    %440 = vmatprep.subr.bf16.mxu0 %v273
    %441 = vmatpush1.bf16.msra.mxu0 %v272
    %442 = vmatprep.subr.bf16.mxu0 %v267
    %443 = vmatpush1.bf16.msra.mxu0 %v266
    %444 = vmatprep.subr.bf16.mxu0 %v261
    %445 = vmatpush1.bf16.msra.mxu0 %v260
    %446 = vmatprep.subr.bf16.mxu0 %v255
    %447 = vmatpush1.bf16.msra.mxu0 %v254
    %448 = vmatprep.subr.bf16.mxu0 0
    %449 = vmatpush2.bf16.msra.mxu0 0
    %450 = vmatprep.subr.bf16.mxu0 0
    %451 = vmatpush2.bf16.msra.mxu0 0
    %452 = vmatprep.subr.bf16.mxu0 0
    %453 = vmatpush2.bf16.msra.mxu0 0
    %454 = vmatprep.subr.bf16.mxu0 0
    %455 = vmatpush2.bf16.msra.mxu0 0
    %456 = vmatprep.subr.bf16.mxu0 0
    %457 = vmatpush2.bf16.msra.mxu0 0
    %458 = vmatprep.subr.bf16.mxu0 0
    %459 = vmatpush2.bf16.msra.mxu0 0
    %460 = vmatprep.subr.bf16.mxu0 0
    %461 = vmatpush2.bf16.msra.mxu0 0
    %462 = vmatprep.subr.bf16.mxu0 0
    %463 = vmatpush2.bf16.msra.mxu0 0
    %464 = vmatprep.mubr.bf16.mxu0 0
    %465 = vmatmul.mubr.bf16.gmra.mxu0 %v104
    %v466 = vpop.f32.mrf.mxu0
    %v467 = vadd.f32 0.0, %v466
    %v468 = vpop.f32.mrf.mxu0
    %v469 = vadd.f32 0.0, %v468
    %v470 = vpop.f32.mrf.mxu0
    %v471 = vadd.f32 0.0, %v470
    %v472 = vpop.f32.mrf.mxu0
    %v473 = vadd.f32 0.0, %v472
    %474 = vdwg.mxu0
    %v475 = vsub.f32 0.0, %v381
    %v476 = vsub.f32 0.0, %v383
    %v477 = vsub.f32 0.0, %v424
    %v478 = vsub.f32 0.0, %v385
    %v479 = vsub.f32 0.0, %v387
    %v480 = vsub.f32 0.0, %v428
    %v481 = vmul.f32 %v475, 1.442695
    %v482 = vpow.pop %v481
    %v483 = vmul.f32 %v476, 1.442695
    %v484 = vpow.pop %v483
    %v485 = vmul.f32 %v477, 1.442695
    %v486 = vpow.pop %v485
    %v487 = vmul.f32 %v478, 1.442695
    %v488 = vpow.pop %v487
    %v489 = vmul.f32 %v479, 1.442695
    %v490 = vpow.pop %v489
    %v491 = vmul.f32 %v480, 1.442695
    %v492 = vpow.pop %v491
    %v493 = vadd.f32 %v482, 1.0
    %v494 = vadd.f32 %v484, 1.0
    %v495 = vadd.f32 %v486, 1.0
    %v496 = vadd.f32 %v488, 1.0
    %v497 = vadd.f32 %v490, 1.0
    %v498 = vadd.f32 %v492, 1.0
    %v499 = vrcp.pop %v493
    %v500 = vrcp.pop %v494
    %v501 = vrcp.pop %v495
    %v502 = vrcp.pop %v496
    %v503 = vrcp.pop %v497
    %v504 = vrcp.pop %v498
    %v505 = vmul.f32 %v381, %v499
    %v506 = vmul.f32 %v383, %v500
    %v507 = vmul.f32 %v424, %v501
    %v508 = vmul.f32 %v385, %v502
    %v509 = vmul.f32 %v387, %v503
    %v510 = vmul.f32 %v428, %v504
    %v511 = vmul.f32 %v505, %v426
    %v512 = vmul.f32 %v506, %v467
    %v513 = vmul.f32 %v507, %v469
    %v514 = vmul.f32 %v508, %v430
    %v515 = vmul.f32 %v509, %v471
    %v516 = vmul.f32 %v510, %v473
    %v517 = vpack.c.bf16 %v514, %v511
    %v518 = vpack.c.bf16 %v515, %v512
    %v519 = vpack.c.bf16 %v516, %v513
    %v520 = vld [vmem:[#allocation2] sm:$0xff]
    %v521 = vld [vmem:[#allocation2 + $0x8] sm:$0xff]
    %v522 = vld [vmem:[#allocation6] sm:$0xf]
    %v523 = vld [vmem:[#allocation6 + $0x4] sm:$0xf]
    %v524 = vld [vmem:[#allocation6 + $0x8] sm:$0xf]
    %v525 = vld [vmem:[#allocation6 + $0xc] sm:$0xf]
    %v526 = vld [vmem:[#allocation6 + $0x10] sm:$0xf]
    %v527 = vld [vmem:[#allocation6 + $0x14] sm:$0xf]
    %v528 = vld [vmem:[#allocation6 + $0x18] sm:$0xf]
    %v529 = vld [vmem:[#allocation6 + $0x1c] sm:$0xf]
    %v530 = vld [vmem:[#allocation6 + $0x20] sm:$0xf]
    %v531 = vld [vmem:[#allocation6 + $0x24] sm:$0xf]
    %v532 = vld [vmem:[#allocation6 + $0x28] sm:$0xf]
    %v533 = vld [vmem:[#allocation6 + $0x2c] sm:$0xf]
    %v534 = vld [vmem:[#allocation6 + $0x30] sm:$0xf]
    %v535 = vld [vmem:[#allocation6 + $0x34] sm:$0xf]
    %v536 = vld [vmem:[#allocation6 + $0x38] sm:$0xf]
    %v537 = vld [vmem:[#allocation6 + $0x3c] sm:$0xf]
    %v538 = vld [vmem:[#allocation6 + $0x40] sm:$0xf]
    %v539 = vld [vmem:[#allocation6 + $0x44] sm:$0xf]
    %v540 = vld [vmem:[#allocation6 + $0x48] sm:$0xf]
    %v541 = vld [vmem:[#allocation6 + $0x4c] sm:$0xf]
    %v542 = vld [vmem:[#allocation6 + $0x50] sm:$0xf]
    %v543 = vld [vmem:[#allocation6 + $0x54] sm:$0xf]
    %v544 = vld [vmem:[#allocation6 + $0x58] sm:$0xf]
    %v545 = vld [vmem:[#allocation6 + $0x5c] sm:$0xf]
    %v546 = vld [vmem:[#allocation6 + $0x60] sm:$0xf]
    %v547 = vld [vmem:[#allocation6 + $0x64] sm:$0xf]
    %v548 = vld [vmem:[#allocation6 + $0x68] sm:$0xf]
    %v549 = vld [vmem:[#allocation6 + $0x6c] sm:$0xf]
    %v550 = vld [vmem:[#allocation6 + $0x70] sm:$0xf]
    %v551 = vld [vmem:[#allocation6 + $0x74] sm:$0xf]
    %v552 = vld [vmem:[#allocation6 + $0x78] sm:$0xf]
    %v553 = vld [vmem:[#allocation6 + $0x7c] sm:$0xf]
    %v554 = vld [vmem:[#allocation6 + $0x80] sm:$0xf]
    %v555 = vld [vmem:[#allocation6 + $0x84] sm:$0xf]
    %v556 = vld [vmem:[#allocation6 + $0x88] sm:$0xf]
    %v557 = vld [vmem:[#allocation6 + $0x8c] sm:$0xf]
    %v558 = vld [vmem:[#allocation6 + $0x90] sm:$0xf]
    %v559 = vld [vmem:[#allocation6 + $0x94] sm:$0xf]
    %v560 = vld [vmem:[#allocation6 + $0x98] sm:$0xf]
    %v561 = vld [vmem:[#allocation6 + $0x9c] sm:$0xf]
    %v562 = vld [vmem:[#allocation6 + $0xa0] sm:$0xf]
    %v563 = vld [vmem:[#allocation6 + $0xa4] sm:$0xf]
    %v564 = vld [vmem:[#allocation6 + $0xa8] sm:$0xf]
    %v565 = vld [vmem:[#allocation6 + $0xac] sm:$0xf]
    %v566 = vld [vmem:[#allocation6 + $0xb0] sm:$0xf]
    %v567 = vld [vmem:[#allocation6 + $0xb4] sm:$0xf]
    %v568 = vld [vmem:[#allocation6 + $0xb8] sm:$0xf]
    %v569 = vld [vmem:[#allocation6 + $0xbc] sm:$0xf]
    %v618 = vunpack.c.l.b16 %v522
    %v619 = vunpack.c.l.b16 %v523
    %v620 = vunpack.c.l.b16 %v524
    %v621 = vunpack.c.l.b16 %v525
    %v622 = vunpack.c.l.b16 %v526
    %v623 = vunpack.c.l.b16 %v527
    %v624 = vunpack.c.l.b16 %v528
    %v625 = vunpack.c.l.b16 %v529
    %v626 = vunpack.c.l.b16 %v530
    %v627 = vunpack.c.l.b16 %v531
    %v628 = vunpack.c.l.b16 %v532
    %v629 = vunpack.c.l.b16 %v533
    %v630 = vunpack.c.l.b16 %v534
    %v631 = vunpack.c.l.b16 %v535
    %v632 = vunpack.c.l.b16 %v536
    %v633 = vunpack.c.l.b16 %v537
    %v634 = vunpack.c.l.b16 %v538
    %v635 = vunpack.c.l.b16 %v539
    %v636 = vunpack.c.l.b16 %v540
    %v637 = vunpack.c.l.b16 %v541
    %v638 = vunpack.c.l.b16 %v542
    %v639 = vunpack.c.l.b16 %v543
    %v640 = vunpack.c.l.b16 %v544
    %v641 = vunpack.c.l.b16 %v545
    %v642 = vunpack.c.l.b16 %v546
    %v643 = vunpack.c.l.b16 %v547
    %v644 = vunpack.c.l.b16 %v548
    %v645 = vunpack.c.l.b16 %v549
    %v646 = vunpack.c.l.b16 %v550
    %v647 = vunpack.c.l.b16 %v551
    %v648 = vunpack.c.l.b16 %v552
    %v649 = vunpack.c.l.b16 %v553
    %v650 = vunpack.c.l.b16 %v554
    %v651 = vunpack.c.l.b16 %v555
    %v652 = vunpack.c.l.b16 %v556
    %v653 = vunpack.c.l.b16 %v557
    %v654 = vunpack.c.l.b16 %v558
    %v655 = vunpack.c.l.b16 %v559
    %v656 = vunpack.c.l.b16 %v560
    %v657 = vunpack.c.l.b16 %v561
    %v658 = vunpack.c.l.b16 %v562
    %v659 = vunpack.c.l.b16 %v563
    %v660 = vunpack.c.l.b16 %v564
    %v661 = vunpack.c.l.b16 %v565
    %v662 = vunpack.c.l.b16 %v566
    %v663 = vunpack.c.l.b16 %v567
    %v664 = vunpack.c.l.b16 %v568
    %v665 = vunpack.c.l.b16 %v569
    %v666 = vpack.c.b16 %v619, %v618
    %v667 = vpack.c.b16 %v621, %v620
    %v668 = vpack.c.b16 %v623, %v622
    %v669 = vpack.c.b16 %v625, %v624
    %v670 = vpack.c.b16 %v627, %v626
    %v671 = vpack.c.b16 %v629, %v628
    %v672 = vpack.c.b16 %v631, %v630
    %v673 = vpack.c.b16 %v633, %v632
    %v674 = vpack.c.b16 %v635, %v634
    %v675 = vpack.c.b16 %v637, %v636
    %v676 = vpack.c.b16 %v639, %v638
    %v677 = vpack.c.b16 %v641, %v640
    %v678 = vpack.c.b16 %v643, %v642
    %v679 = vpack.c.b16 %v645, %v644
    %v680 = vpack.c.b16 %v647, %v646
    %v681 = vpack.c.b16 %v649, %v648
    %v682 = vpack.c.b16 %v651, %v650
    %v683 = vpack.c.b16 %v653, %v652
    %v684 = vpack.c.b16 %v655, %v654
    %v685 = vpack.c.b16 %v657, %v656
    %v686 = vpack.c.b16 %v659, %v658
    %v687 = vpack.c.b16 %v661, %v660
    %v688 = vpack.c.b16 %v663, %v662
    %v689 = vpack.c.b16 %v665, %v664
    %714 = vmatprep.subr.bf16.mxu0 0
    %715 = vmatpush1.bf16.msra.mxu0 %v673
    %716 = vmatprep.subr.bf16.mxu0 0
    %717 = vmatpush1.bf16.msra.mxu0 %v672
    %718 = vmatprep.subr.bf16.mxu0 0
    %719 = vmatpush1.bf16.msra.mxu0 %v671
    %720 = vmatprep.subr.bf16.mxu0 0
    %721 = vmatpush1.bf16.msra.mxu0 %v670
    %722 = vmatprep.subr.bf16.mxu0 0
    %723 = vmatpush1.bf16.msra.mxu0 %v669
    %724 = vmatprep.subr.bf16.mxu0 0
    %725 = vmatpush1.bf16.msra.mxu0 %v668
    %726 = vmatprep.subr.bf16.mxu0 0
    %727 = vmatpush1.bf16.msra.mxu0 %v667
    %728 = vmatprep.subr.bf16.mxu0 0
    %729 = vmatpush1.bf16.msra.mxu0 %v666
    %730 = vmatprep.subr.bf16.mxu0 0
    %731 = vmatpush2.bf16.msra.mxu0 %v681
    %732 = vmatprep.subr.bf16.mxu0 0
    %733 = vmatpush2.bf16.msra.mxu0 %v680
    %734 = vmatprep.subr.bf16.mxu0 0
    %735 = vmatpush2.bf16.msra.mxu0 %v679
    %736 = vmatprep.subr.bf16.mxu0 0
    %737 = vmatpush2.bf16.msra.mxu0 %v678
    %738 = vmatprep.subr.bf16.mxu0 0
    %739 = vmatpush2.bf16.msra.mxu0 %v677
    %740 = vmatprep.subr.bf16.mxu0 0
    %741 = vmatpush2.bf16.msra.mxu0 %v676
    %742 = vmatprep.subr.bf16.mxu0 0
    %743 = vmatpush2.bf16.msra.mxu0 %v675
    %744 = vmatprep.subr.bf16.mxu0 0
    %745 = vmatpush2.bf16.msra.mxu0 %v674
    %746 = vmatprep.mubr.bf16.mxu0 %v518
    %747 = vmatmul.mubr.bf16.gmra.mxu0 %v517
    %v748 = vpop.f32.mrf.mxu0
    %v749 = vadd.f32 0.0, %v748
    %v750 = vpop.f32.mrf.mxu0
    %v751 = vpop.f32.mrf.mxu0
    %v752 = vadd.f32 0.0, %v751
    %v753 = vpop.f32.mrf.mxu0
    %754 = vdwg.mxu0
    %755 = vmatprep.subr.bf16.mxu0 0
    %756 = vmatpush1.bf16.msra.mxu0 %v689
    %757 = vmatprep.subr.bf16.mxu0 0
    %758 = vmatpush1.bf16.msra.mxu0 %v688
    %759 = vmatprep.subr.bf16.mxu0 0
    %760 = vmatpush1.bf16.msra.mxu0 %v687
    %761 = vmatprep.subr.bf16.mxu0 0
    %762 = vmatpush1.bf16.msra.mxu0 %v686
    %763 = vmatprep.subr.bf16.mxu0 0
    %764 = vmatpush1.bf16.msra.mxu0 %v685
    %765 = vmatprep.subr.bf16.mxu0 0
    %766 = vmatpush1.bf16.msra.mxu0 %v684
    %767 = vmatprep.subr.bf16.mxu0 0
    %768 = vmatpush1.bf16.msra.mxu0 %v683
    %769 = vmatprep.subr.bf16.mxu0 0
    %770 = vmatpush1.bf16.msra.mxu0 %v682
    %771 = vmatprep.subr.bf16.mxu0 0
    %772 = vmatpush2.bf16.msra.mxu0 0
    %773 = vmatprep.subr.bf16.mxu0 0
    %774 = vmatpush2.bf16.msra.mxu0 0
    %775 = vmatprep.subr.bf16.mxu0 0
    %776 = vmatpush2.bf16.msra.mxu0 0
    %777 = vmatprep.subr.bf16.mxu0 0
    %778 = vmatpush2.bf16.msra.mxu0 0
    %779 = vmatprep.subr.bf16.mxu0 0
    %780 = vmatpush2.bf16.msra.mxu0 0
    %781 = vmatprep.subr.bf16.mxu0 0
    %782 = vmatpush2.bf16.msra.mxu0 0
    %783 = vmatprep.subr.bf16.mxu0 0
    %784 = vmatpush2.bf16.msra.mxu0 0
    %785 = vmatprep.subr.bf16.mxu0 0
    %786 = vmatpush2.bf16.msra.mxu0 0
    %787 = vmatprep.mubr.bf16.mxu0 0
    %788 = vmatmul.mubr.bf16.gmra.mxu0 %v519
    %v789 = vpop.f32.mrf.mxu0
    %v790 = vadd.f32 %v749, %v789
    %v791 = vpop.f32.mrf.mxu0
    %v792 = vpop.f32.mrf.mxu0
    %v793 = vadd.f32 %v752, %v792
    %v794 = vpop.f32.mrf.mxu0
    %795 = vdwg.mxu0
    %v796 = vadd.f32 %v520, %v790
    %v797 = vadd.f32 %v521, %v793
    %798 = vst [vmem:[#allocation2] sm:$0xff] %v796
    %799 = vst [vmem:[#allocation2 + $0x8] sm:$0xff] %v797
    // Predicated region
    $region26: #{feed_forward.1} parent=1 // pred_check
      %p800 = pneg %p44
    $region27: #{feed_forward.1} parent=1 // pred_check_branch
      %802 = sbr.rel (%p800) target = $region29
    $region28: #{feed_forward.1} parent=1 // pred_region
      %v803 = vld [vmem:[#allocation2] sm:$0xff]
      %v804 = vld [vmem:[#allocation2 + $0x8] sm:$0xff]
      %805 = vst [vmem:[#allocation8] sm:$0xff] %v803
      %806 = vst [vmem:[#allocation8 + $0x8] sm:$0xff] %v804
    $region29: #{feed_forward.1} parent=1 // pred_fallthru
      _
    // Predicated region
    $region30: #{feed_forward.1} parent=1 // pred_check
      _
    $region31: #{feed_forward.1} parent=1 // pred_check_branch
      %808 = sbr.rel (0) target = $region33
    $region32: #{feed_forward.1} parent=1 // pred_region
      %s810 = ssub.s32 256, 256
      %811 = vsyncadd [#allocation5], %s810
      %s812 = sshll.u32 [#allocation8], 4
      %s813 = int_to_ptr.vmem [resolvable:$true] %s812
      %818 = dma.vmem_to_hbm [thread:$0]  %s813, 256, %s3, [#allocation5], 128, 128, 8
    $region33: #{feed_forward.1} parent=1 // pred_fallthru
      _
    // Predicated region
    $region34: #{feed_forward.1} parent=1 // pred_check
      _
    $region35: #{feed_forward.1} parent=1 // pred_check_branch
      %820 = sbr.rel (0) target = $region37
    $region36: #{feed_forward.1} parent=1 // pred_region
      %821 = dma.done [#allocation5], 256
    $region37: #{feed_forward.1} parent=1 // pred_fallthru
      _
    %822 = vsyncpa [#allocation4], 1
    %823 = vsyncpa [#allocation7], 1
    %824 = vsyncpa [#allocation5], 1

</llo_original>
